<compile_context>
chip_gen: v6e
topology: v6e:2x2x1
jax: 0.10.0
libtpu: 0.0.40
codegen_flags: <defaults>
</compile_context>

<pallas_src>
import functools

import jax
import jax.numpy as jnp
from jax.experimental import pallas as pl
from jax.experimental.pallas import tpu as pltpu

LANE = 128
# Double-buffered (input + output) block budget; fits v5e's 16 MiB default
# scoped VMEM and leaves headroom on v6e (32 MiB default) / v7x (32 MiB).
VMEM_BUDGET_BYTES = 12 * 1024 * 1024


def _tsvec_kernel(w_ref, x_ref, o_ref, *, rate):
    # w_ref: (rate,) f32 in SMEM; x_ref: (rate, tm, width) in VMEM;
    # o_ref: (tm, width).  `rate` is a small static constant -> unrolled VPU FMA.
    acc = w_ref[0] * x_ref[0].astype(jnp.float32)
    for r in range(1, rate):
        acc = acc + w_ref[r] * x_ref[r].astype(jnp.float32)
    o_ref[...] = acc.astype(o_ref.dtype)


def tsvec(x, weight, rate, *, vmem_budget_bytes=VMEM_BUDGET_BYTES):
    """Weighted sum over the leading `rate` groups of the batch axis.

    x:      (N, C, H, W)  with N % rate == 0
    weight: (rate,)
    returns (N // rate, C, H, W)
    """
    n = x.shape[0]
    assert n % rate == 0, "batch must be divisible by rate"
    out_shape = (n // rate,) + tuple(x.shape[1:])

    m = 1
    for d in out_shape:
        m *= d

    itemsize = jnp.dtype(x.dtype).itemsize
    sublane = 16 if itemsize == 2 else 8  # bf16 packs two rows per sublane

    # Lane-dense flat view, zero-padded to a multiple of 128 when necessary.
    x_flat = x.reshape(rate, m)
    m_pad = pl.cdiv(m, LANE) * LANE
    if m_pad != m:
        x_flat = jnp.pad(x_flat, ((0, 0), (0, m_pad - m)))

    # Widest lane dimension that divides the padded volume -> fewer, bigger
    # DMA descriptors and wide unmasked stores.
    width = LANE
    for cand in (1024, 512, 256):
        if m_pad % cand == 0:
            width = cand
            break
    rows = m_pad // width

    # Per-r-slice element budget so the double-buffered (rate input slices +
    # 1 output slice) blocks fit the VMEM budget.
    budget_elems = vmem_budget_bytes // (2 * (rate + 1) * itemsize)
    tm_target = max(sublane, (budget_elems // width) // sublane * sublane)

    if rows <= tm_target:
        if rows >= 2 * sublane:
            # Small-ish input: use 2 grid steps so both v7x TensorCores are fed.
            tm = pl.cdiv(pl.cdiv(rows, 2), sublane) * sublane
        else:
            tm = rows  # block == full dim (allowed even if not a multiple of 8)
    else:
        tm = tm_target

    grid = (pl.cdiv(rows, tm),)  # masked tail handles rows % tm != 0
    x3 = x_flat.reshape(rate, rows, width)

    out2 = pl.pallas_call(
        functools.partial(_tsvec_kernel, rate=rate),
        out_shape=jax.ShapeDtypeStruct((rows, width), x.dtype),
        grid_spec=pl.GridSpec(
            grid=grid,
            in_specs=[
                # small weight vector lives fully in SMEM
                pl.BlockSpec(memory_space=pltpu.MemorySpace.SMEM),
                # full rate axis, one large lane-dense row tile per grid step
                pl.BlockSpec((rate, tm, width), lambda i: (0, i, 0)),
            ],
            out_specs=pl.BlockSpec((tm, width), lambda i: (i, 0)),
        ),
        compiler_params=pltpu.CompilerParams(
            dimension_semantics=("parallel",)
        ),
    )(weight.astype(jnp.float32), x3)

    out_flat = out2.reshape(m_pad)
    if m_pad != m:
        out_flat = out_flat[:m]
    return out_flat.reshape(out_shape)


def tsvec_ref(x, weight, rate):
    n = x.shape[0]
    xr = x.reshape(rate, n // rate, *x.shape[1:])
    return jnp.einsum("i,i...->...", weight, xr)


if __name__ == "__main__":
    key = jax.random.PRNGKey(0)

    # Test 1: small shape matching the module's intended use (single tile).
    rate = 4
    N, C, H, W = 8, 4, 16, 16
    kx, kw, kx2, kw2 = jax.random.split(key, 4)
    x = jax.random.normal(kx, (N, C, H, W), dtype=jnp.float32)
    weight = jax.random.normal(kw, (rate,), dtype=jnp.float32)

    out = jax.block_until_ready(tsvec(x, weight, rate))
    ref = tsvec_ref(x, weight, rate)
    assert out.shape == (N // rate, C, H, W)
    assert jnp.allclose(out, ref, atol=1e-5, rtol=1e-5), "mismatch vs reference (1)"

    # Test 2: shape that exercises the cdiv grid + masked tail (rows % tm != 0)
    # and a >1-step parallel grid.
    rate2 = 2
    N2, C2, H2, W2 = 8, 8, 24, 24
    x2 = jax.random.normal(kx2, (N2, C2, H2, W2), dtype=jnp.float32)
    weight2 = jax.random.normal(kw2, (rate2,), dtype=jnp.float32)

    out2 = jax.block_until_ready(tsvec(x2, weight2, rate2))
    ref2 = tsvec_ref(x2, weight2, rate2)
    assert out2.shape == (N2 // rate2, C2, H2, W2)
    assert jnp.allclose(out2, ref2, atol=1e-5, rtol=1e-5), "mismatch vs reference (2)"

    print("KERNEL_OK")
</pallas_src>

<mosaic_0001>
module attributes {stable_mosaic.version = 11 : i64} {
  func.func @_tsvec_kernel(%arg0: i32, %arg1: memref<4xf32, #tpu.memory_space<smem>>, %arg2: memref<4x2x1024xf32, #tpu.memory_space<vmem>>, %arg3: memref<2x1024xf32, #tpu.memory_space<vmem>>) attributes {dimension_semantics = [#tpu.dimension_semantics<parallel>], iteration_bounds = array<i64: 1>, scalar_prefetch = 0 : i64, scratch_operands = 0 : i64, tpu.core_type = #tpu.core_type<tc>, window_params = [{transform_indices = @transform_0, window_bounds = array<i64: 4>}, {transform_indices = @transform_1, window_bounds = array<i64: 4, 2, 1024>}, {transform_indices = @transform_2, window_bounds = array<i64: 2, 1024>}]} {
    %c0 = arith.constant 0 : index
    %0 = memref.load %arg1[%c0] : memref<4xf32, #tpu.memory_space<smem>>
    %c0_0 = arith.constant 0 : index
    %c0_1 = arith.constant 0 : index
    %c0_2 = arith.constant 0 : index
    %1 = vector.load %arg2[%c0_0, %c0_1, %c0_2] : memref<4x2x1024xf32, #tpu.memory_space<vmem>>, vector<1x2x1024xf32>
    %2 = vector.shape_cast %1 : vector<1x2x1024xf32> to vector<2x1024xf32>
    %3 = vector.broadcast %0 : f32 to vector<2x1024xf32>
    %4 = arith.mulf %3, %2 : vector<2x1024xf32>
    %c1 = arith.constant 1 : index
    %5 = memref.load %arg1[%c1] : memref<4xf32, #tpu.memory_space<smem>>
    %c1_3 = arith.constant 1 : index
    %c0_4 = arith.constant 0 : index
    %c0_5 = arith.constant 0 : index
    %6 = vector.load %arg2[%c1_3, %c0_4, %c0_5] : memref<4x2x1024xf32, #tpu.memory_space<vmem>>, vector<1x2x1024xf32>
    %7 = vector.shape_cast %6 : vector<1x2x1024xf32> to vector<2x1024xf32>
    %8 = vector.broadcast %5 : f32 to vector<2x1024xf32>
    %9 = arith.mulf %8, %7 : vector<2x1024xf32>
    %10 = arith.addf %4, %9 : vector<2x1024xf32>
    %c2 = arith.constant 2 : index
    %11 = memref.load %arg1[%c2] : memref<4xf32, #tpu.memory_space<smem>>
    %c2_6 = arith.constant 2 : index
    %c0_7 = arith.constant 0 : index
    %c0_8 = arith.constant 0 : index
    %12 = vector.load %arg2[%c2_6, %c0_7, %c0_8] : memref<4x2x1024xf32, #tpu.memory_space<vmem>>, vector<1x2x1024xf32>
    %13 = vector.shape_cast %12 : vector<1x2x1024xf32> to vector<2x1024xf32>
    %14 = vector.broadcast %11 : f32 to vector<2x1024xf32>
    %15 = arith.mulf %14, %13 : vector<2x1024xf32>
    %16 = arith.addf %10, %15 : vector<2x1024xf32>
    %c3 = arith.constant 3 : index
    %17 = memref.load %arg1[%c3] : memref<4xf32, #tpu.memory_space<smem>>
    %c3_9 = arith.constant 3 : index
    %c0_10 = arith.constant 0 : index
    %c0_11 = arith.constant 0 : index
    %18 = vector.load %arg2[%c3_9, %c0_10, %c0_11] : memref<4x2x1024xf32, #tpu.memory_space<vmem>>, vector<1x2x1024xf32>
    %19 = vector.shape_cast %18 : vector<1x2x1024xf32> to vector<2x1024xf32>
    %20 = vector.broadcast %17 : f32 to vector<2x1024xf32>
    %21 = arith.mulf %20, %19 : vector<2x1024xf32>
    %22 = arith.addf %16, %21 : vector<2x1024xf32>
    %c0_12 = arith.constant 0 : index
    %c0_13 = arith.constant 0 : index
    %23 = vector.load %arg3[%c0_12, %c0_13] : memref<2x1024xf32, #tpu.memory_space<vmem>>, vector<2x1024xf32>
    tpu.vector_store %arg3[%c0_12, %c0_13], %22 {strides = array<i32>} : memref<2x1024xf32, #tpu.memory_space<vmem>>, vector<2x1024xf32>,
    return
  }
  func.func @transform_0(%arg0: i32) -> i32 {
    %c0_i32 = arith.constant 0 : i32
    %c0_i32_0 = arith.constant 0 : i32
    return %c0_i32 : i32
  }
  func.func @transform_1(%arg0: i32) -> (i32, i32, i32) {
    %c0_i32 = arith.constant 0 : i32
    %c0_i32_0 = arith.constant 0 : i32
    %c0_i32_1 = arith.constant 0 : i32
    return %c0_i32, %arg0, %c0_i32_0 : i32, i32, i32
  }
  func.func @transform_2(%arg0: i32) -> (i32, i32) {
    %c0_i32 = arith.constant 0 : i32
    %c0_i32_0 = arith.constant 0 : i32
    return %arg0, %c0_i32 : i32, i32
  }
}

</mosaic_0001>

<llo_original>
// kernel: tpu_custom_call.1
$region0: #{tpu_custom_call.1}
  #allocation0 [shape = 'u32[]', space=smem, size = 0x4, offset = 0x4, fixed_abs, tag = 'smem constant byte address 0x4 - core index']
  #allocation1 [shape = 'u32[144,128]{1,0:T(1,128)}', space=vmem, size = 0x12000, scoped, tag = 'internal scratch']
  %s0 = inlined_call_operand.hbm [shape: f32[4], index: 0, kind: input, shape index: {}]
  %s1 = inlined_call_operand.hbm [shape: f32[4,2,1024], index: 1, kind: input, shape index: {}]
  %s2 = inlined_call_operand.hbm [shape: f32[2,1024], index: 2, kind: output, shape index: {}]
  %s3 = sld [smem:[#allocation0]]
  $region26: #{tpu_custom_call.1} parent=0
    _
  %s5 = ssub.s32 1, %s3
  %s6 = scalar_select 0, %s5, %s3
  $region1: #{tpu_custom_call.1} parent=0
    #allocation2 [shape = 'u8[512]{0}', space=smem, size = 0x200, scoped, tag = 'input window, operand 0, single buffered']
    #allocation3 [shape = 's32[1]{0}', space=sflag, size = 0x4, scoped, tag = 'scoped memory for tpu_custom_call.1']
    #allocation4 [shape = 's32[1]{0}', space=sflag, size = 0x4, scoped, tag = 'scoped memory for tpu_custom_call.1']
    #allocation5 [shape = 's32[1]{0}', space=sflag, size = 0x4, scoped, tag = 'scoped memory for tpu_custom_call.1']
    #allocation6 [shape = 'u8[32768]{0}', space=vmem, size = 0x8000, scoped, tag = 'input window, operand 1, single buffered']
    #allocation7 [shape = 'u8[8192]{0}', space=vmem, size = 0x2000, scoped, tag = 'output window, operand 0, single buffered']
    %7 = vsyncpa [#allocation5], 0
    %8 = vsyncpa [#allocation3], 0
    %9 = vsyncpa [#allocation4], 0
    // Predicated region
    $region2: #{tpu_custom_call.1} parent=1 // pred_check
      _
    $region3: #{tpu_custom_call.1} parent=1 // pred_check_branch
      %11 = sbr.rel (0) target = $region5
    $region4: #{tpu_custom_call.1} parent=1 // pred_region
      %s13 = ssub.s32 16, 16
      %14 = vsyncadd [#allocation5], %s13
      %17 = dma.hbm_to_smem %s0, 16, [#allocation2], [#allocation5]
    $region5: #{tpu_custom_call.1} parent=1 // pred_fallthru
      _
    // Predicated region
    $region6: #{tpu_custom_call.1} parent=1 // pred_check
      _
    $region7: #{tpu_custom_call.1} parent=1 // pred_check_branch
      %19 = sbr.rel (0) target = $region9
    $region8: #{tpu_custom_call.1} parent=1 // pred_region
      %s21 = ssub.s32 1024, 1024
      %22 = vsyncadd [#allocation3], %s21
      %s23 = sshll.u32 [#allocation6], 4
      %s24 = int_to_ptr.vmem [resolvable:$true] %s23
      %29 = dma.hbm_to_vmem [thread:$0]  %s1, 1024, %s24, [#allocation3], 256, 256, 16
    $region9: #{tpu_custom_call.1} parent=1 // pred_fallthru
      _
    // Predicated region
    $region10: #{tpu_custom_call.1} parent=1 // pred_check
      _
    $region11: #{tpu_custom_call.1} parent=1 // pred_check_branch
      %31 = sbr.rel (0) target = $region13
    $region12: #{tpu_custom_call.1} parent=1 // pred_region
      %32 = dma.done [#allocation5], 16
    $region13: #{tpu_custom_call.1} parent=1 // pred_fallthru
      _
    // Predicated region
    $region14: #{tpu_custom_call.1} parent=1 // pred_check
      _
    $region15: #{tpu_custom_call.1} parent=1 // pred_check_branch
      %34 = sbr.rel (0) target = $region17
    $region16: #{tpu_custom_call.1} parent=1 // pred_region
      %35 = dma.done [#allocation3], 1024
    $region17: #{tpu_custom_call.1} parent=1 // pred_fallthru
      _
    %36 = sfence
    %s37 = sld [smem:[#allocation2]]
    %v38 = vld [vmem:[#allocation6] sm:$0xff]
    %v39 = vld [vmem:[#allocation6 + $0x8] sm:$0xff]
    %v40 = vstv %s37
    %v41 = vmul.f32 %v40, %v38
    %v42 = vmul.f32 %v40, %v39
    %s43 = sld [smem:[#allocation2 + $0x1]]
    %s44 = scalar_lea.vmem [#allocation6], 16
    %v45 = vld [vmem:[%s44] sm:$0xff]
    %v46 = vld [vmem:[%s44 + $0x8] sm:$0xff]
    %v47 = vstv %s43
    %v48 = vmul.f32 %v47, %v45
    %v49 = vmul.f32 %v47, %v46
    %v50 = vadd.f32 %v41, %v48
    %v51 = vadd.f32 %v42, %v49
    %s52 = sld [smem:[#allocation2 + $0x2]]
    %s53 = scalar_lea.vmem [#allocation6], 32
    %v54 = vld [vmem:[%s53] sm:$0xff]
    %v55 = vld [vmem:[%s53 + $0x8] sm:$0xff]
    %v56 = vstv %s52
    %v57 = vmul.f32 %v56, %v54
    %v58 = vmul.f32 %v56, %v55
    %v59 = vadd.f32 %v50, %v57
    %v60 = vadd.f32 %v51, %v58
    %s61 = sld [smem:[#allocation2 + $0x3]]
    %s62 = scalar_lea.vmem [#allocation6], 48
    %v63 = vld [vmem:[%s62] sm:$0xff]
    %v64 = vld [vmem:[%s62 + $0x8] sm:$0xff]
    %v65 = vstv %s61
    %v66 = vmul.f32 %v65, %v63
    %v67 = vmul.f32 %v65, %v64
    %v68 = vadd.f32 %v59, %v66
    %v69 = vadd.f32 %v60, %v67
    %70 = vst [vmem:[#allocation7] sm:$0xff] %v68
    %71 = vst [vmem:[#allocation7 + $0x8] sm:$0xff] %v69
    // Predicated region
    $region18: #{tpu_custom_call.1} parent=1 // pred_check
      _
    $region19: #{tpu_custom_call.1} parent=1 // pred_check_branch
      %73 = sbr.rel (0) target = $region21
    $region20: #{tpu_custom_call.1} parent=1 // pred_region
      %s75 = ssub.s32 256, 256
      %76 = vsyncadd [#allocation4], %s75
      %s78 = sshll.u32 [#allocation7], 4
      %s79 = int_to_ptr.vmem [resolvable:$true] %s78
      %81 = dma.vmem_to_hbm [thread:$0]  %s79, 256, %s2, [#allocation4]
    $region21: #{tpu_custom_call.1} parent=1 // pred_fallthru
      _
    // Predicated region
    $region22: #{tpu_custom_call.1} parent=1 // pred_check
      _
    $region23: #{tpu_custom_call.1} parent=1 // pred_check_branch
      %83 = sbr.rel (0) target = $region25
    $region24: #{tpu_custom_call.1} parent=1 // pred_region
      %84 = dma.done [#allocation4], 256
    $region25: #{tpu_custom_call.1} parent=1 // pred_fallthru
      _
    %85 = vsyncpa [#allocation3], 1
    %86 = vsyncpa [#allocation4], 1
    %87 = vsyncpa [#allocation5], 1

</llo_original>
